<compile_context>
chip_gen: v7x
topology: tpu7x:2x2x1
jax: 0.10.0
libtpu: 0.0.40
codegen_flags: <defaults>
</compile_context>

<pallas_src>
import jax
import jax.numpy as jnp
from jax.experimental import pallas as pl
from jax.experimental.pallas import tpu as pltpu

# ---- problem sizes (small, consistent with Net: mid_dims = output_dims // 2) ----
B = 8                         # batch
OUTPUT_DIMS = 64              # utility.output_dims (backbone feature dim)
MID_DIMS = OUTPUT_DIMS // 2   # 32
FEAT_DIMS = 32                # utility.feats_dims
DOMAIN_NUM = 2                # len(utility.src)
CLASS_NUM = 16                # utility.label_num
DC = DOMAIN_NUM * CLASS_NUM   # 32
BN_EPS = 1e-5

assert MID_DIMS == FEAT_DIMS == DC, "weight-slab packing assumes 32-wide columns"


def _elu(v):
    # nn.ELU(alpha=1.0) — keep the select form (do NOT blend with mask*exp).
    return jnp.where(v > 0, v, jnp.exp(v) - 1.0)


def _bn_train(v, gamma, beta):
    # nn.BatchNorm1d training mode (batch stats, biased var), scale/shift form.
    mean = jnp.mean(v, axis=0, keepdims=True)
    var = jnp.mean((v - mean) ** 2, axis=0, keepdims=True)
    scale = gamma * jax.lax.rsqrt(var + BN_EPS)
    shift = beta - mean * scale
    return v * scale + shift


def net_kernel(x_ref, w1_ref, wslab_ref, aff_ref, out_ref):
    x = x_ref[...]
    w1 = w1_ref[...]
    wslab = wslab_ref[...]
    aff = aff_ref[...]

    # static lane slices of the packed weight slab
    w2 = wslab[:, 0 * 32:1 * 32]
    w3 = wslab[:, 1 * 32:2 * 32]
    w4 = wslab[:, 2 * 32:3 * 32]
    wc = wslab[:, 3 * 32:4 * 32]

    # static row slices of the packed affine slab
    b1, b2, g2, be2 = aff[0:1], aff[1:2], aff[2:3], aff[3:4]
    b3, b4, g4, be4, bc = aff[4:5], aff[5:6], aff[6:7], aff[7:8], aff[8:9]

    # ForwardLayer: Linear->ELU->Linear->BN->ELU->Linear->ELU->Linear->BN->ELU
    h = _elu(jnp.dot(x, w1, preferred_element_type=jnp.float32) + b1)
    h = _elu(_bn_train(jnp.dot(h, w2, preferred_element_type=jnp.float32) + b2, g2, be2))
    h = _elu(jnp.dot(h, w3, preferred_element_type=jnp.float32) + b3)
    feats = _elu(_bn_train(jnp.dot(h, w4, preferred_element_type=jnp.float32) + b4, g4, be4))

    # Classifiers (mode != 'multi'): both per-domain Linears fused into one matmul.
    logits2d = jnp.dot(feats, wc, preferred_element_type=jnp.float32) + bc

    # single dense (B, 64) store: [feats | logits]
    out_ref[...] = jnp.concatenate([feats, logits2d], axis=-1)


def _pack_params(params):
    (w1, b1, w2, b2, g2, be2, w3, b3, w4, b4, g4, be4, wc, bc) = params
    # wc: (D, F, C) -> (F, D*C) so that column d*C + c == wc[d, :, c]
    wc_flat = jnp.transpose(wc, (1, 0, 2)).reshape(FEAT_DIMS, DC)
    bc_flat = bc.reshape(1, DC)
    wslab = jnp.concatenate([w2, w3, w4, wc_flat], axis=1)                # (32, 128)
    aff = jnp.concatenate([b1, b2, g2, be2, b3, b4, g4, be4, bc_flat], 0)  # (9, 32)
    return w1, wslab, aff


@jax.jit
def net_forward(x, params):
    w1, wslab, aff = _pack_params(params)
    vmem = pl.BlockSpec(memory_space=pltpu.MemorySpace.VMEM)
    out = pl.pallas_call(
        net_kernel,
        out_shape=jax.ShapeDtypeStruct((B, FEAT_DIMS + DC), jnp.float32),
        in_specs=[vmem, vmem, vmem, vmem],
        out_specs=vmem,
    )(x, w1, wslab, aff)
    feats = out[:, :FEAT_DIMS]
    logits = out[:, FEAT_DIMS:].reshape(B, DOMAIN_NUM, CLASS_NUM).transpose(1, 0, 2)
    return feats, logits


def init_params(key):
    ks = jax.random.split(key, 6)

    def lin(k, fan_in, fan_out):
        # PyTorch Linear default init: U(-1/sqrt(fan_in), 1/sqrt(fan_in))
        bound = 1.0 / jnp.sqrt(fan_in)
        kw, kb = jax.random.split(k)
        w = jax.random.uniform(kw, (fan_in, fan_out), jnp.float32, -bound, bound)
        b = jax.random.uniform(kb, (1, fan_out), jnp.float32, -bound, bound)
        return w, b

    w1, b1 = lin(ks[0], OUTPUT_DIMS, MID_DIMS)
    w2, b2 = lin(ks[1], MID_DIMS, MID_DIMS)
    g2 = jnp.ones((1, MID_DIMS), jnp.float32)
    be2 = jnp.zeros((1, MID_DIMS), jnp.float32)
    w3, b3 = lin(ks[2], MID_DIMS, FEAT_DIMS)
    w4, b4 = lin(ks[3], FEAT_DIMS, FEAT_DIMS)
    g4 = jnp.ones((1, FEAT_DIMS), jnp.float32)
    be4 = jnp.zeros((1, FEAT_DIMS), jnp.float32)

    bound_c = 1.0 / jnp.sqrt(FEAT_DIMS)
    wc = jax.random.uniform(ks[4], (DOMAIN_NUM, FEAT_DIMS, CLASS_NUM),
                            jnp.float32, -bound_c, bound_c)
    bc = jax.random.uniform(ks[5], (DOMAIN_NUM, 1, CLASS_NUM),
                            jnp.float32, -bound_c, bound_c)

    return (w1, b1, w2, b2, g2, be2, w3, b3, w4, b4, g4, be4, wc, bc)


def reference_forward(x, params):
    # Pure-JAX reference of the same math (unpacked params, explicit per-domain loop).
    (w1, b1, w2, b2, g2, be2, w3, b3, w4, b4, g4, be4, wc, bc) = params
    h = _elu(x @ w1 + b1)
    h = _elu(_bn_train(h @ w2 + b2, g2, be2))
    h = _elu(h @ w3 + b3)
    feats = _elu(_bn_train(h @ w4 + b4, g4, be4))
    logits = jnp.stack([feats @ wc[i] + bc[i] for i in range(DOMAIN_NUM)], axis=0)
    return feats, logits


if __name__ == "__main__":
    key = jax.random.PRNGKey(0)
    kx, kp = jax.random.split(key)
    x = jax.random.normal(kx, (B, OUTPUT_DIMS), jnp.float32)
    params = init_params(kp)

    feats, logits = net_forward(x, params)
    jax.block_until_ready((feats, logits))

    feats_ref, logits_ref = reference_forward(x, params)
    assert feats.shape == (B, FEAT_DIMS)
    assert logits.shape == (DOMAIN_NUM, B, CLASS_NUM)
    assert jnp.allclose(feats, feats_ref, atol=1e-4, rtol=1e-4)
    assert jnp.allclose(logits, logits_ref, atol=1e-4, rtol=1e-4)

    print("KERNEL_OK")
</pallas_src>

<mosaic_0001>
module attributes {stable_mosaic.version = 11 : i64} {
  func.func @net_kernel(%arg0: memref<8x64xf32, #tpu.memory_space<vmem>>, %arg1: memref<64x32xf32, #tpu.memory_space<vmem>>, %arg2: memref<32x128xf32, #tpu.memory_space<vmem>>, %arg3: memref<9x32xf32, #tpu.memory_space<vmem>>, %arg4: memref<8x64xf32, #tpu.memory_space<vmem>>) attributes {dimension_semantics = [], scalar_prefetch = 0 : i64, scratch_operands = 0 : i64, tpu.core_type = #tpu.core_type<tc>} {
    %c0 = arith.constant 0 : index
    %c0_0 = arith.constant 0 : index
    %0 = vector.load %arg0[%c0, %c0_0] : memref<8x64xf32, #tpu.memory_space<vmem>>, vector<8x64xf32>
    %c0_1 = arith.constant 0 : index
    %c0_2 = arith.constant 0 : index
    %1 = vector.load %arg1[%c0_1, %c0_2] : memref<64x32xf32, #tpu.memory_space<vmem>>, vector<64x32xf32>
    %c0_3 = arith.constant 0 : index
    %c0_4 = arith.constant 0 : index
    %2 = vector.load %arg2[%c0_3, %c0_4] : memref<32x128xf32, #tpu.memory_space<vmem>>, vector<32x128xf32>
    %c0_5 = arith.constant 0 : index
    %c0_6 = arith.constant 0 : index
    %3 = vector.load %arg3[%c0_5, %c0_6] : memref<9x32xf32, #tpu.memory_space<vmem>>, vector<9x32xf32>
    %4 = vector.extract_strided_slice %2 {offsets = [0, 0], sizes = [32, 32], strides = [1, 1]} : vector<32x128xf32> to vector<32x32xf32>
    %5 = vector.extract_strided_slice %2 {offsets = [0, 32], sizes = [32, 32], strides = [1, 1]} : vector<32x128xf32> to vector<32x32xf32>
    %6 = vector.extract_strided_slice %2 {offsets = [0, 64], sizes = [32, 32], strides = [1, 1]} : vector<32x128xf32> to vector<32x32xf32>
    %7 = vector.extract_strided_slice %2 {offsets = [0, 96], sizes = [32, 32], strides = [1, 1]} : vector<32x128xf32> to vector<32x32xf32>
    %8 = vector.extract_strided_slice %3 {offsets = [0, 0], sizes = [1, 32], strides = [1, 1]} : vector<9x32xf32> to vector<1x32xf32>
    %9 = vector.extract_strided_slice %3 {offsets = [1, 0], sizes = [1, 32], strides = [1, 1]} : vector<9x32xf32> to vector<1x32xf32>
    %10 = vector.extract_strided_slice %3 {offsets = [2, 0], sizes = [1, 32], strides = [1, 1]} : vector<9x32xf32> to vector<1x32xf32>
    %11 = vector.extract_strided_slice %3 {offsets = [3, 0], sizes = [1, 32], strides = [1, 1]} : vector<9x32xf32> to vector<1x32xf32>
    %12 = vector.extract_strided_slice %3 {offsets = [4, 0], sizes = [1, 32], strides = [1, 1]} : vector<9x32xf32> to vector<1x32xf32>
    %13 = vector.extract_strided_slice %3 {offsets = [5, 0], sizes = [1, 32], strides = [1, 1]} : vector<9x32xf32> to vector<1x32xf32>
    %14 = vector.extract_strided_slice %3 {offsets = [6, 0], sizes = [1, 32], strides = [1, 1]} : vector<9x32xf32> to vector<1x32xf32>
    %15 = vector.extract_strided_slice %3 {offsets = [7, 0], sizes = [1, 32], strides = [1, 1]} : vector<9x32xf32> to vector<1x32xf32>
    %16 = vector.extract_strided_slice %3 {offsets = [8, 0], sizes = [1, 32], strides = [1, 1]} : vector<9x32xf32> to vector<1x32xf32>
    %cst = arith.constant dense<0.000000e+00> : vector<8x32xf32>
    %17 = tpu.matmul %0, %1, %cst {dimension_numbers = #tpu.dot_dimension_numbers<[1], [0], [0], [1], [0, 0, 1, 1], [], []>} : vector<8x64xf32>, vector<64x32xf32>, vector<8x32xf32> -> vector<8x32xf32>
    %18 = vector.broadcast %8 : vector<1x32xf32> to vector<8x32xf32>
    %19 = arith.addf %17, %18 : vector<8x32xf32>
    %cst_7 = arith.constant 0.000000e+00 : f32
    %20 = vector.broadcast %cst_7 : f32 to vector<8x32xf32>
    %21 = arith.cmpf ogt, %19, %20 : vector<8x32xf32>
    %22 = math.exp %19 : vector<8x32xf32>
    %cst_8 = arith.constant 1.000000e+00 : f32
    %23 = vector.broadcast %cst_8 : f32 to vector<8x32xf32>
    %24 = arith.subf %22, %23 : vector<8x32xf32>
    %25 = arith.select %21, %19, %24 : vector<8x32xi1>, vector<8x32xf32>
    %cst_9 = arith.constant dense<0.000000e+00> : vector<8x32xf32>
    %26 = tpu.matmul %25, %4, %cst_9 {dimension_numbers = #tpu.dot_dimension_numbers<[1], [0], [0], [1], [0, 0, 1, 1], [], []>} : vector<8x32xf32>, vector<32x32xf32>, vector<8x32xf32> -> vector<8x32xf32>
    %27 = vector.broadcast %9 : vector<1x32xf32> to vector<8x32xf32>
    %28 = arith.addf %26, %27 : vector<8x32xf32>
    %cst_10 = arith.constant dense<0.000000e+00> : vector<32xf32>
    %29 = vector.multi_reduction <add>, %28, %cst_10 [0] : vector<8x32xf32> to vector<32xf32>
    %30 = vector.shape_cast %29 : vector<32xf32> to vector<1x32xf32>
    %cst_11 = arith.constant 8.000000e+00 : f32
    %31 = vector.broadcast %cst_11 : f32 to vector<1x32xf32>
    %32 = arith.divf %30, %31 : vector<1x32xf32>
    %33 = vector.broadcast %32 : vector<1x32xf32> to vector<8x32xf32>
    %34 = arith.subf %28, %33 : vector<8x32xf32>
    %35 = arith.mulf %34, %34 : vector<8x32xf32>
    %cst_12 = arith.constant dense<0.000000e+00> : vector<32xf32>
    %36 = vector.multi_reduction <add>, %35, %cst_12 [0] : vector<8x32xf32> to vector<32xf32>
    %37 = vector.shape_cast %36 : vector<32xf32> to vector<1x32xf32>
    %cst_13 = arith.constant 8.000000e+00 : f32
    %38 = vector.broadcast %cst_13 : f32 to vector<1x32xf32>
    %39 = arith.divf %37, %38 : vector<1x32xf32>
    %cst_14 = arith.constant 9.99999974E-6 : f32
    %40 = vector.broadcast %cst_14 : f32 to vector<1x32xf32>
    %41 = arith.addf %39, %40 : vector<1x32xf32>
    %42 = math.rsqrt %41 : vector<1x32xf32>
    %43 = arith.mulf %10, %42 : vector<1x32xf32>
    %44 = arith.mulf %32, %43 : vector<1x32xf32>
    %45 = arith.subf %11, %44 : vector<1x32xf32>
    %46 = vector.broadcast %43 : vector<1x32xf32> to vector<8x32xf32>
    %47 = arith.mulf %28, %46 : vector<8x32xf32>
    %48 = vector.broadcast %45 : vector<1x32xf32> to vector<8x32xf32>
    %49 = arith.addf %47, %48 : vector<8x32xf32>
    %cst_15 = arith.constant 0.000000e+00 : f32
    %50 = vector.broadcast %cst_15 : f32 to vector<8x32xf32>
    %51 = arith.cmpf ogt, %49, %50 : vector<8x32xf32>
    %52 = math.exp %49 : vector<8x32xf32>
    %cst_16 = arith.constant 1.000000e+00 : f32
    %53 = vector.broadcast %cst_16 : f32 to vector<8x32xf32>
    %54 = arith.subf %52, %53 : vector<8x32xf32>
    %55 = arith.select %51, %49, %54 : vector<8x32xi1>, vector<8x32xf32>
    %cst_17 = arith.constant dense<0.000000e+00> : vector<8x32xf32>
    %56 = tpu.matmul %55, %5, %cst_17 {dimension_numbers = #tpu.dot_dimension_numbers<[1], [0], [0], [1], [0, 0, 1, 1], [], []>} : vector<8x32xf32>, vector<32x32xf32>, vector<8x32xf32> -> vector<8x32xf32>
    %57 = vector.broadcast %12 : vector<1x32xf32> to vector<8x32xf32>
    %58 = arith.addf %56, %57 : vector<8x32xf32>
    %cst_18 = arith.constant 0.000000e+00 : f32
    %59 = vector.broadcast %cst_18 : f32 to vector<8x32xf32>
    %60 = arith.cmpf ogt, %58, %59 : vector<8x32xf32>
    %61 = math.exp %58 : vector<8x32xf32>
    %cst_19 = arith.constant 1.000000e+00 : f32
    %62 = vector.broadcast %cst_19 : f32 to vector<8x32xf32>
    %63 = arith.subf %61, %62 : vector<8x32xf32>
    %64 = arith.select %60, %58, %63 : vector<8x32xi1>, vector<8x32xf32>
    %cst_20 = arith.constant dense<0.000000e+00> : vector<8x32xf32>
    %65 = tpu.matmul %64, %6, %cst_20 {dimension_numbers = #tpu.dot_dimension_numbers<[1], [0], [0], [1], [0, 0, 1, 1], [], []>} : vector<8x32xf32>, vector<32x32xf32>, vector<8x32xf32> -> vector<8x32xf32>
    %66 = vector.broadcast %13 : vector<1x32xf32> to vector<8x32xf32>
    %67 = arith.addf %65, %66 : vector<8x32xf32>
    %cst_21 = arith.constant dense<0.000000e+00> : vector<32xf32>
    %68 = vector.multi_reduction <add>, %67, %cst_21 [0] : vector<8x32xf32> to vector<32xf32>
    %69 = vector.shape_cast %68 : vector<32xf32> to vector<1x32xf32>
    %cst_22 = arith.constant 8.000000e+00 : f32
    %70 = vector.broadcast %cst_22 : f32 to vector<1x32xf32>
    %71 = arith.divf %69, %70 : vector<1x32xf32>
    %72 = vector.broadcast %71 : vector<1x32xf32> to vector<8x32xf32>
    %73 = arith.subf %67, %72 : vector<8x32xf32>
    %74 = arith.mulf %73, %73 : vector<8x32xf32>
    %cst_23 = arith.constant dense<0.000000e+00> : vector<32xf32>
    %75 = vector.multi_reduction <add>, %74, %cst_23 [0] : vector<8x32xf32> to vector<32xf32>
    %76 = vector.shape_cast %75 : vector<32xf32> to vector<1x32xf32>
    %cst_24 = arith.constant 8.000000e+00 : f32
    %77 = vector.broadcast %cst_24 : f32 to vector<1x32xf32>
    %78 = arith.divf %76, %77 : vector<1x32xf32>
    %cst_25 = arith.constant 9.99999974E-6 : f32
    %79 = vector.broadcast %cst_25 : f32 to vector<1x32xf32>
    %80 = arith.addf %78, %79 : vector<1x32xf32>
    %81 = math.rsqrt %80 : vector<1x32xf32>
    %82 = arith.mulf %14, %81 : vector<1x32xf32>
    %83 = arith.mulf %71, %82 : vector<1x32xf32>
    %84 = arith.subf %15, %83 : vector<1x32xf32>
    %85 = vector.broadcast %82 : vector<1x32xf32> to vector<8x32xf32>
    %86 = arith.mulf %67, %85 : vector<8x32xf32>
    %87 = vector.broadcast %84 : vector<1x32xf32> to vector<8x32xf32>
    %88 = arith.addf %86, %87 : vector<8x32xf32>
    %cst_26 = arith.constant 0.000000e+00 : f32
    %89 = vector.broadcast %cst_26 : f32 to vector<8x32xf32>
    %90 = arith.cmpf ogt, %88, %89 : vector<8x32xf32>
    %91 = math.exp %88 : vector<8x32xf32>
    %cst_27 = arith.constant 1.000000e+00 : f32
    %92 = vector.broadcast %cst_27 : f32 to vector<8x32xf32>
    %93 = arith.subf %91, %92 : vector<8x32xf32>
    %94 = arith.select %90, %88, %93 : vector<8x32xi1>, vector<8x32xf32>
    %cst_28 = arith.constant dense<0.000000e+00> : vector<8x32xf32>
    %95 = tpu.matmul %94, %7, %cst_28 {dimension_numbers = #tpu.dot_dimension_numbers<[1], [0], [0], [1], [0, 0, 1, 1], [], []>} : vector<8x32xf32>, vector<32x32xf32>, vector<8x32xf32> -> vector<8x32xf32>
    %96 = vector.broadcast %16 : vector<1x32xf32> to vector<8x32xf32>
    %97 = arith.addf %95, %96 : vector<8x32xf32>
    %98 = tpu.concatenate %94, %97 in 1 : vector<8x32xf32>, vector<8x32xf32> -> vector<8x64xf32>
    %c0_29 = arith.constant 0 : index
    %c0_30 = arith.constant 0 : index
    %99 = vector.load %arg4[%c0_29, %c0_30] : memref<8x64xf32, #tpu.memory_space<vmem>>, vector<8x64xf32>
    tpu.vector_store %arg4[%c0_29, %c0_30], %98 {strides = array<i32>} : memref<8x64xf32, #tpu.memory_space<vmem>>, vector<8x64xf32>,
    return
  }
}

</mosaic_0001>

<llo_original>
// kernel: net_forward.1
$region0: #{net_forward.1}
  #allocation0 [shape = 'u32[]', space=smem, size = 0x4, offset = 0x4, fixed_abs, tag = 'smem constant byte address 0x4 - core index']
  #allocation1 [shape = 'u32[144,128]{1,0:T(1,128)}', space=vmem, size = 0x12000, scoped, tag = 'internal scratch']
  %s0 = inlined_call_operand.vmem [shape: f32[8,64], index: 0, kind: input, shape index: {}]
  %s1 = inlined_call_operand.vmem [shape: f32[64,32], index: 1, kind: input, shape index: {}]
  %s2 = inlined_call_operand.vmem [shape: f32[32,128], index: 2, kind: input, shape index: {}]
  %s3 = inlined_call_operand.vmem [shape: f32[9,32], index: 3, kind: input, shape index: {}]
  %s4 = inlined_call_operand.vmem [shape: f32[8,64], index: 4, kind: output, shape index: {}]
  %s5 = sld [smem:[#allocation0]]
  $region26: #{net_forward.1} parent=0
    _
  %s7 = ssub.s32 1, %s5
  %s8 = scalar_select 0, %s7, %s5
  // Predicated region
  $region2: #{net_forward.1} parent=0 // pred_check
    _
  $region3: #{net_forward.1} parent=0 // pred_check_branch
    %10 = sbr.rel (0) target = $region5
  $region4: #{net_forward.1} parent=0 // pred_region
    _
  $region5: #{net_forward.1} parent=0 // pred_fallthru
    _
  // Predicated region
  $region6: #{net_forward.1} parent=0 // pred_check
    _
  $region7: #{net_forward.1} parent=0 // pred_check_branch
    %12 = sbr.rel (0) target = $region9
  $region8: #{net_forward.1} parent=0 // pred_region
    _
  $region9: #{net_forward.1} parent=0 // pred_fallthru
    _
  // Predicated region
  $region10: #{net_forward.1} parent=0 // pred_check
    _
  $region11: #{net_forward.1} parent=0 // pred_check_branch
    %14 = sbr.rel (0) target = $region13
  $region12: #{net_forward.1} parent=0 // pred_region
    _
  $region13: #{net_forward.1} parent=0 // pred_fallthru
    _
  // Predicated region
  $region14: #{net_forward.1} parent=0 // pred_check
    _
  $region15: #{net_forward.1} parent=0 // pred_check_branch
    %16 = sbr.rel (0) target = $region17
  $region16: #{net_forward.1} parent=0 // pred_region
    _
  $region17: #{net_forward.1} parent=0 // pred_fallthru
    _
  %v17 = vld [vmem:[%s0] sm:$0xff]
  %v18 = vld [vmem:[%s1] sm:$0xff]
  %v19 = vld [vmem:[%s1 + $0x8] sm:$0xff]
  %v20 = vld [vmem:[%s1 + $0x10] sm:$0xff]
  %v21 = vld [vmem:[%s1 + $0x18] sm:$0xff]
  %v22 = vld [vmem:[%s1 + $0x20] sm:$0xff]
  %v23 = vld [vmem:[%s1 + $0x28] sm:$0xff]
  %v24 = vld [vmem:[%s1 + $0x30] sm:$0xff]
  %v25 = vld [vmem:[%s1 + $0x38] sm:$0xff]
  %v26 = vld [vmem:[%s2] sm:$0xff]
  %v27 = vld [vmem:[%s2 + $0x8] sm:$0xff]
  %v28 = vld [vmem:[%s2 + $0x10] sm:$0xff]
  %v29 = vld [vmem:[%s2 + $0x18] sm:$0xff]
  %v30 = vld [vmem:[%s3] sm:$0xff]
  %v31 = vld [vmem:[%s3 + $0x8] sm:$0x1]
  %v32 = vlaneseq
  %v33 = vshrl.u32 %v32, 7
  %v34 = vsub.s32 0, %v33
  %v35 = vrot.slane %v30, %v34
  %vm36 = vcmask 523264
  %v38 = vsel %vm36, %v17, 0
  %40 = vmatprep.subr.mxu0 0.0
  %41 = vmatpush1.msra.mxu0 %v18
  %42 = vmatprep.subr.mxu0 0.0
  %43 = vmatpush1.msra.mxu0 %v19
  %44 = vmatprep.subr.mxu0 0.0
  %45 = vmatpush1.msra.mxu0 %v20
  %46 = vmatprep.subr.mxu0 0.0
  %47 = vmatpush1.msra.mxu0 %v21
  %48 = vmatprep.subr.mxu0 0.0
  %49 = vmatpush1.msra.mxu0 %v22
  %50 = vmatprep.subr.mxu0 0.0
  %51 = vmatpush1.msra.mxu0 %v23
  %52 = vmatprep.subr.mxu0 0.0
  %53 = vmatpush1.msra.mxu0 %v24
  %54 = vmatprep.subr.mxu0 0.0
  %55 = vmatpush1.msra.mxu0 %v25
  %56 = vmatprep.subr.mxu0 0.0
  %57 = vmatpush1.msra.mxu0 0.0
  %58 = vmatprep.subr.mxu0 0.0
  %59 = vmatpush1.msra.mxu0 0.0
  %60 = vmatprep.subr.mxu0 0.0
  %61 = vmatpush1.msra.mxu0 0.0
  %62 = vmatprep.subr.mxu0 0.0
  %63 = vmatpush1.msra.mxu0 0.0
  %64 = vmatprep.subr.mxu0 0.0
  %65 = vmatpush1.msra.mxu0 0.0
  %66 = vmatprep.subr.mxu0 0.0
  %67 = vmatpush1.msra.mxu0 0.0
  %68 = vmatprep.subr.mxu0 0.0
  %69 = vmatpush1.msra.mxu0 0.0
  %70 = vmatprep.subr.mxu0 0.0
  %71 = vmatpush1.msra.mxu0 0.0
  %72 = vmatprep.subr.mxu0 0.0
  %73 = vmatpush1.msra.mxu0 0.0
  %74 = vmatprep.subr.mxu0 0.0
  %75 = vmatpush1.msra.mxu0 0.0
  %76 = vmatprep.subr.mxu0 0.0
  %77 = vmatpush1.msra.mxu0 0.0
  %78 = vmatprep.subr.mxu0 0.0
  %79 = vmatpush1.msra.mxu0 0.0
  %80 = vmatprep.subr.mxu0 0.0
  %81 = vmatpush1.msra.mxu0 0.0
  %82 = vmatprep.subr.mxu0 0.0
  %83 = vmatpush1.msra.mxu0 0.0
  %84 = vmatprep.subr.mxu0 0.0
  %85 = vmatpush1.msra.mxu0 0.0
  %86 = vmatprep.subr.mxu0 0.0
  %87 = vmatpush1.msra.mxu0 0.0
  %88 = vmatprep.subr.mxu0 0.0
  %89 = vmatpush1.msra.mxu0 0.0
  %90 = vmatprep.subr.mxu0 0.0
  %91 = vmatpush1.msra.mxu0 0.0
  %92 = vmatprep.subr.mxu0 0.0
  %93 = vmatpush1.msra.mxu0 0.0
  %94 = vmatprep.subr.mxu0 0.0
  %95 = vmatpush1.msra.mxu0 0.0
  %96 = vmatprep.subr.mxu0 0.0
  %97 = vmatpush1.msra.mxu0 0.0
  %98 = vmatprep.subr.mxu0 0.0
  %99 = vmatpush1.msra.mxu0 0.0
  %100 = vmatprep.subr.mxu0 0.0
  %101 = vmatpush1.msra.mxu0 0.0
  %102 = vmatprep.subr.mxu0 0.0
  %103 = vmatpush1.msra.mxu0 0.0
  %104 = vmatprep.mubr.f32.mxu0 0.0
  %105 = vmatmul.mubr.f32.gmra.mrb[0].mxu0 %v38
  %v106 = vpop.f32.mrb[0].mxu0
  %v107 = vadd.f32 %v35, %v106
  %v108 = vpop.f32.mrb[0].mxu0
  %109 = vdwg.mxu0
  %vm110 = vcmp.gt.f32.partialorder %v107, 0.0
  %v111 = vmul.f32 %v107, 1.442695
  %v112 = vpow.pop %v111
  %v113 = vsub.f32 %v112, 1.0
  %v114 = vsel %vm110, %v107, %v113
  %v115 = vlaneseq
  %v116 = vshrl.u32 %v115, 7
  %v117 = vsub.s32 1, %v116
  %v118 = vrot.slane %v30, %v117
  %vm119 = vcmask 261120
  %v121 = vsel %vm119, %v114, 0
  %123 = vmatprep.subr.mxu0 0.0
  %124 = vmatpush1.msra.mxu0 %v26
  %125 = vmatprep.subr.mxu0 0.0
  %126 = vmatpush1.msra.mxu0 %v27
  %127 = vmatprep.subr.mxu0 0.0
  %128 = vmatpush1.msra.mxu0 %v28
  %129 = vmatprep.subr.mxu0 0.0
  %130 = vmatpush1.msra.mxu0 %v29
  %131 = vmatprep.subr.mxu0 0.0
  %132 = vmatpush1.msra.mxu0 0.0
  %133 = vmatprep.subr.mxu0 0.0
  %134 = vmatpush1.msra.mxu0 0.0
  %135 = vmatprep.subr.mxu0 0.0
  %136 = vmatpush1.msra.mxu0 0.0
  %137 = vmatprep.subr.mxu0 0.0
  %138 = vmatpush1.msra.mxu0 0.0
  %139 = vmatprep.subr.mxu0 0.0
  %140 = vmatpush1.msra.mxu0 0.0
  %141 = vmatprep.subr.mxu0 0.0
  %142 = vmatpush1.msra.mxu0 0.0
  %143 = vmatprep.subr.mxu0 0.0
  %144 = vmatpush1.msra.mxu0 0.0
  %145 = vmatprep.subr.mxu0 0.0
  %146 = vmatpush1.msra.mxu0 0.0
  %147 = vmatprep.subr.mxu0 0.0
  %148 = vmatpush1.msra.mxu0 0.0
  %149 = vmatprep.subr.mxu0 0.0
  %150 = vmatpush1.msra.mxu0 0.0
  %151 = vmatprep.subr.mxu0 0.0
  %152 = vmatpush1.msra.mxu0 0.0
  %153 = vmatprep.subr.mxu0 0.0
  %154 = vmatpush1.msra.mxu0 0.0
  %155 = vmatprep.subr.mxu0 0.0
  %156 = vmatpush1.msra.mxu0 0.0
  %157 = vmatprep.subr.mxu0 0.0
  %158 = vmatpush1.msra.mxu0 0.0
  %159 = vmatprep.subr.mxu0 0.0
  %160 = vmatpush1.msra.mxu0 0.0
  %161 = vmatprep.subr.mxu0 0.0
  %162 = vmatpush1.msra.mxu0 0.0
  %163 = vmatprep.subr.mxu0 0.0
  %164 = vmatpush1.msra.mxu0 0.0
  %165 = vmatprep.subr.mxu0 0.0
  %166 = vmatpush1.msra.mxu0 0.0
  %167 = vmatprep.subr.mxu0 0.0
  %168 = vmatpush1.msra.mxu0 0.0
  %169 = vmatprep.subr.mxu0 0.0
  %170 = vmatpush1.msra.mxu0 0.0
  %171 = vmatprep.subr.mxu0 0.0
  %172 = vmatpush1.msra.mxu0 0.0
  %173 = vmatprep.subr.mxu0 0.0
  %174 = vmatpush1.msra.mxu0 0.0
  %175 = vmatprep.subr.mxu0 0.0
  %176 = vmatpush1.msra.mxu0 0.0
  %177 = vmatprep.subr.mxu0 0.0
  %178 = vmatpush1.msra.mxu0 0.0
  %179 = vmatprep.subr.mxu0 0.0
  %180 = vmatpush1.msra.mxu0 0.0
  %181 = vmatprep.subr.mxu0 0.0
  %182 = vmatpush1.msra.mxu0 0.0
  %183 = vmatprep.subr.mxu0 0.0
  %184 = vmatpush1.msra.mxu0 0.0
  %185 = vmatprep.subr.mxu0 0.0
  %186 = vmatpush1.msra.mxu0 0.0
  %187 = vmatprep.mubr.f32.mxu0 0.0
  %188 = vmatmul.mubr.f32.gmra.mrb[0].mxu0 %v121
  %v189 = vpop.f32.mrb[0].mxu0
  %v190 = vadd.f32 %v118, %v189
  %v191 = vpop.f32.mrb[0].mxu0
  %192 = vdwg.mxu0
  %v193 = vsel %vm119, %v190, 0.0
  %v194 = vrot.slane %v193, 4
  %v195 = vadd.f32 %v193, %v194
  %v196 = vrot.slane %v195, 2
  %v197 = vadd.f32 %v195, %v196
  %v198 = vrot.slane %v197, 1
  %v199 = vadd.f32 %v197, %v198
  %v200 = vrcp.pop 8.0
  %v201 = vmul.f32 %v199, %v200
  %v202 = vsub.f32 %v190, %v201
  %v203 = vmul.f32 %v202, %v202
  %v204 = vsel %vm119, %v203, 0.0
  %v205 = vrot.slane %v204, 4
  %v206 = vadd.f32 %v204, %v205
  %v207 = vrot.slane %v206, 2
  %v208 = vadd.f32 %v206, %v207
  %v209 = vrot.slane %v208, 1
  %v210 = vadd.f32 %v208, %v209
  %v211 = vmul.f32 %v210, %v200
  %v212 = vadd.f32 %v211, 1e-05
  %v213 = vrsqrt.pop %v212
  %v214 = vmul.f32 %v30, %v213
  %v215 = vmul.f32 %v201, %v214
  %v217 = vrot.slane %v215, 7
  %v219 = vsub.f32 %v30, %v217
  %v220 = vlaneseq
  %v221 = vshrl.u32 %v220, 7
  %v222 = vsub.s32 2, %v221
  %v223 = vrot.slane %v214, %v222
  %v224 = vmul.f32 %v190, %v223
  %v225 = vlaneseq
  %v226 = vshrl.u32 %v225, 7
  %v227 = vsub.s32 3, %v226
  %v228 = vrot.slane %v219, %v227
  %v229 = vadd.f32 %v224, %v228
  %vm230 = vcmp.gt.f32.partialorder %v229, 0.0
  %v231 = vmul.f32 %v229, 1.442695
  %v232 = vpow.pop %v231
  %v233 = vsub.f32 %v232, 1.0
  %v234 = vsel %vm230, %v229, %v233
  %v235 = vlaneseq
  %v236 = vshrl.u32 %v235, 7
  %v237 = vsub.s32 4, %v236
  %v238 = vrot.slane %v30, %v237
  %243 = vrot.lane.b32.xlu0 %v26, 96
  %v244 = vpop.permute.xlu0 %243
  %245 = vrot.lane.b32.xlu0 %v27, 96
  %v246 = vpop.permute.xlu0 %245
  %247 = vrot.lane.b32.xlu0 %v28, 96
  %v248 = vpop.permute.xlu0 %247
  %249 = vrot.lane.b32.xlu0 %v29, 96
  %v250 = vpop.permute.xlu0 %249
  %v256 = vsel %vm119, %v234, 0
  %258 = vmatprep.subr.mxu0 0.0
  %259 = vmatpush1.msra.mxu0 %v244
  %260 = vmatprep.subr.mxu0 0.0
  %261 = vmatpush1.msra.mxu0 %v246
  %262 = vmatprep.subr.mxu0 0.0
  %263 = vmatpush1.msra.mxu0 %v248
  %264 = vmatprep.subr.mxu0 0.0
  %265 = vmatpush1.msra.mxu0 %v250
  %266 = vmatprep.subr.mxu0 0.0
  %267 = vmatpush1.msra.mxu0 0.0
  %268 = vmatprep.subr.mxu0 0.0
  %269 = vmatpush1.msra.mxu0 0.0
  %270 = vmatprep.subr.mxu0 0.0
  %271 = vmatpush1.msra.mxu0 0.0
  %272 = vmatprep.subr.mxu0 0.0
  %273 = vmatpush1.msra.mxu0 0.0
  %274 = vmatprep.subr.mxu0 0.0
  %275 = vmatpush1.msra.mxu0 0.0
  %276 = vmatprep.subr.mxu0 0.0
  %277 = vmatpush1.msra.mxu0 0.0
  %278 = vmatprep.subr.mxu0 0.0
  %279 = vmatpush1.msra.mxu0 0.0
  %280 = vmatprep.subr.mxu0 0.0
  %281 = vmatpush1.msra.mxu0 0.0
  %282 = vmatprep.subr.mxu0 0.0
  %283 = vmatpush1.msra.mxu0 0.0
  %284 = vmatprep.subr.mxu0 0.0
  %285 = vmatpush1.msra.mxu0 0.0
  %286 = vmatprep.subr.mxu0 0.0
  %287 = vmatpush1.msra.mxu0 0.0
  %288 = vmatprep.subr.mxu0 0.0
  %289 = vmatpush1.msra.mxu0 0.0
  %290 = vmatprep.subr.mxu0 0.0
  %291 = vmatpush1.msra.mxu0 0.0
  %292 = vmatprep.subr.mxu0 0.0
  %293 = vmatpush1.msra.mxu0 0.0
  %294 = vmatprep.subr.mxu0 0.0
  %295 = vmatpush1.msra.mxu0 0.0
  %296 = vmatprep.subr.mxu0 0.0
  %297 = vmatpush1.msra.mxu0 0.0
  %298 = vmatprep.subr.mxu0 0.0
  %299 = vmatpush1.msra.mxu0 0.0
  %300 = vmatprep.subr.mxu0 0.0
  %301 = vmatpush1.msra.mxu0 0.0
  %302 = vmatprep.subr.mxu0 0.0
  %303 = vmatpush1.msra.mxu0 0.0
  %304 = vmatprep.subr.mxu0 0.0
  %305 = vmatpush1.msra.mxu0 0.0
  %306 = vmatprep.subr.mxu0 0.0
  %307 = vmatpush1.msra.mxu0 0.0
  %308 = vmatprep.subr.mxu0 0.0
  %309 = vmatpush1.msra.mxu0 0.0
  %310 = vmatprep.subr.mxu0 0.0
  %311 = vmatpush1.msra.mxu0 0.0
  %312 = vmatprep.subr.mxu0 0.0
  %313 = vmatpush1.msra.mxu0 0.0
  %314 = vmatprep.subr.mxu0 0.0
  %315 = vmatpush1.msra.mxu0 0.0
  %316 = vmatprep.subr.mxu0 0.0
  %317 = vmatpush1.msra.mxu0 0.0
  %318 = vmatprep.subr.mxu0 0.0
  %319 = vmatpush1.msra.mxu0 0.0
  %320 = vmatprep.subr.mxu0 0.0
  %321 = vmatpush1.msra.mxu0 0.0
  %322 = vmatprep.mubr.f32.mxu0 0.0
  %323 = vmatmul.mubr.f32.gmra.mrb[0].mxu0 %v256
  %v324 = vpop.f32.mrb[0].mxu0
  %v325 = vadd.f32 %v238, %v324
  %v326 = vpop.f32.mrb[0].mxu0
  %327 = vdwg.mxu0
  %vm328 = vcmp.gt.f32.partialorder %v325, 0.0
  %v329 = vmul.f32 %v325, 1.442695
  %v330 = vpow.pop %v329
  %v331 = vsub.f32 %v330, 1.0
  %v332 = vsel %vm328, %v325, %v331
  %v333 = vlaneseq
  %v334 = vshrl.u32 %v333, 7
  %v335 = vsub.s32 5, %v334
  %v336 = vrot.slane %v30, %v335
  %337 = vrot.lane.b32.xlu0 %v26, 64
  %v338 = vpop.permute.xlu0 %337
  %339 = vrot.lane.b32.xlu0 %v27, 64
  %v340 = vpop.permute.xlu0 %339
  %341 = vrot.lane.b32.xlu0 %v28, 64
  %v342 = vpop.permute.xlu0 %341
  %343 = vrot.lane.b32.xlu0 %v29, 64
  %v344 = vpop.permute.xlu0 %343
  %v350 = vsel %vm119, %v332, 0
  %352 = vmatprep.subr.mxu0 0.0
  %353 = vmatpush1.msra.mxu0 %v338
  %354 = vmatprep.subr.mxu0 0.0
  %355 = vmatpush1.msra.mxu0 %v340
  %356 = vmatprep.subr.mxu0 0.0
  %357 = vmatpush1.msra.mxu0 %v342
  %358 = vmatprep.subr.mxu0 0.0
  %359 = vmatpush1.msra.mxu0 %v344
  %360 = vmatprep.subr.mxu0 0.0
  %361 = vmatpush1.msra.mxu0 0.0
  %362 = vmatprep.subr.mxu0 0.0
  %363 = vmatpush1.msra.mxu0 0.0
  %364 = vmatprep.subr.mxu0 0.0
  %365 = vmatpush1.msra.mxu0 0.0
  %366 = vmatprep.subr.mxu0 0.0
  %367 = vmatpush1.msra.mxu0 0.0
  %368 = vmatprep.subr.mxu0 0.0
  %369 = vmatpush1.msra.mxu0 0.0
  %370 = vmatprep.subr.mxu0 0.0
  %371 = vmatpush1.msra.mxu0 0.0
  %372 = vmatprep.subr.mxu0 0.0
  %373 = vmatpush1.msra.mxu0 0.0
  %374 = vmatprep.subr.mxu0 0.0
  %375 = vmatpush1.msra.mxu0 0.0
  %376 = vmatprep.subr.mxu0 0.0
  %377 = vmatpush1.msra.mxu0 0.0
  %378 = vmatprep.subr.mxu0 0.0
  %379 = vmatpush1.msra.mxu0 0.0
  %380 = vmatprep.subr.mxu0 0.0
  %381 = vmatpush1.msra.mxu0 0.0
  %382 = vmatprep.subr.mxu0 0.0
  %383 = vmatpush1.msra.mxu0 0.0
  %384 = vmatprep.subr.mxu0 0.0
  %385 = vmatpush1.msra.mxu0 0.0
  %386 = vmatprep.subr.mxu0 0.0
  %387 = vmatpush1.msra.mxu0 0.0
  %388 = vmatprep.subr.mxu0 0.0
  %389 = vmatpush1.msra.mxu0 0.0
  %390 = vmatprep.subr.mxu0 0.0
  %391 = vmatpush1.msra.mxu0 0.0
  %392 = vmatprep.subr.mxu0 0.0
  %393 = vmatpush1.msra.mxu0 0.0
  %394 = vmatprep.subr.mxu0 0.0
  %395 = vmatpush1.msra.mxu0 0.0
  %396 = vmatprep.subr.mxu0 0.0
  %397 = vmatpush1.msra.mxu0 0.0
  %398 = vmatprep.subr.mxu0 0.0
  %399 = vmatpush1.msra.mxu0 0.0
  %400 = vmatprep.subr.mxu0 0.0
  %401 = vmatpush1.msra.mxu0 0.0
  %402 = vmatprep.subr.mxu0 0.0
  %403 = vmatpush1.msra.mxu0 0.0
  %404 = vmatprep.subr.mxu0 0.0
  %405 = vmatpush1.msra.mxu0 0.0
  %406 = vmatprep.subr.mxu0 0.0
  %407 = vmatpush1.msra.mxu0 0.0
  %408 = vmatprep.subr.mxu0 0.0
  %409 = vmatpush1.msra.mxu0 0.0
  %410 = vmatprep.subr.mxu0 0.0
  %411 = vmatpush1.msra.mxu0 0.0
  %412 = vmatprep.subr.mxu0 0.0
  %413 = vmatpush1.msra.mxu0 0.0
  %414 = vmatprep.subr.mxu0 0.0
  %415 = vmatpush1.msra.mxu0 0.0
  %416 = vmatprep.mubr.f32.mxu0 0.0
  %417 = vmatmul.mubr.f32.gmra.mrb[0].mxu0 %v350
  %v418 = vpop.f32.mrb[0].mxu0
  %v419 = vadd.f32 %v336, %v418
  %v420 = vpop.f32.mrb[0].mxu0
  %421 = vdwg.mxu0
  %v422 = vsel %vm119, %v419, 0.0
  %v423 = vrot.slane %v422, 4
  %v424 = vadd.f32 %v422, %v423
  %v425 = vrot.slane %v424, 2
  %v426 = vadd.f32 %v424, %v425
  %v427 = vrot.slane %v426, 1
  %v428 = vadd.f32 %v426, %v427
  %v429 = vmul.f32 %v428, %v200
  %v430 = vsub.f32 %v419, %v429
  %v431 = vmul.f32 %v430, %v430
  %v432 = vsel %vm119, %v431, 0.0
  %v433 = vrot.slane %v432, 4
  %v434 = vadd.f32 %v432, %v433
  %v435 = vrot.slane %v434, 2
  %v436 = vadd.f32 %v434, %v435
  %v437 = vrot.slane %v436, 1
  %v438 = vadd.f32 %v436, %v437
  %v439 = vmul.f32 %v438, %v200
  %v440 = vadd.f32 %v439, 1e-05
  %v441 = vrsqrt.pop %v440
  %v442 = vmul.f32 %v30, %v441
  %v443 = vmul.f32 %v429, %v442
  %v445 = vrot.slane %v443, 7
  %v447 = vsub.f32 %v30, %v445
  %v448 = vlaneseq
  %v449 = vshrl.u32 %v448, 7
  %v450 = vsub.s32 6, %v449
  %v451 = vrot.slane %v442, %v450
  %v452 = vmul.f32 %v419, %v451
  %v453 = vlaneseq
  %v454 = vshrl.u32 %v453, 7
  %v455 = vsub.s32 7, %v454
  %v456 = vrot.slane %v447, %v455
  %v457 = vadd.f32 %v452, %v456
  %vm458 = vcmp.gt.f32.partialorder %v457, 0.0
  %v459 = vmul.f32 %v457, 1.442695
  %v460 = vpow.pop %v459
  %v461 = vsub.f32 %v460, 1.0
  %v462 = vsel %vm458, %v457, %v461
  %v463 = vlaneseq
  %v464 = vshrl.u32 %v463, 7
  %v465 = vsub.s32 0, %v464
  %v466 = vrot.slane %v31, %v465
  %467 = vrot.lane.b32.xlu0 %v26, 32
  %v468 = vpop.permute.xlu0 %467
  %469 = vrot.lane.b32.xlu0 %v27, 32
  %v470 = vpop.permute.xlu0 %469
  %471 = vrot.lane.b32.xlu0 %v28, 32
  %v472 = vpop.permute.xlu0 %471
  %473 = vrot.lane.b32.xlu0 %v29, 32
  %v474 = vpop.permute.xlu0 %473
  %v480 = vsel %vm119, %v462, 0
  %482 = vmatprep.subr.mxu0 0.0
  %483 = vmatpush1.msra.mxu0 %v468
  %484 = vmatprep.subr.mxu0 0.0
  %485 = vmatpush1.msra.mxu0 %v470
  %486 = vmatprep.subr.mxu0 0.0
  %487 = vmatpush1.msra.mxu0 %v472
  %488 = vmatprep.subr.mxu0 0.0
  %489 = vmatpush1.msra.mxu0 %v474
  %490 = vmatprep.subr.mxu0 0.0
  %491 = vmatpush1.msra.mxu0 0.0
  %492 = vmatprep.subr.mxu0 0.0
  %493 = vmatpush1.msra.mxu0 0.0
  %494 = vmatprep.subr.mxu0 0.0
  %495 = vmatpush1.msra.mxu0 0.0
  %496 = vmatprep.subr.mxu0 0.0
  %497 = vmatpush1.msra.mxu0 0.0
  %498 = vmatprep.subr.mxu0 0.0
  %499 = vmatpush1.msra.mxu0 0.0
  %500 = vmatprep.subr.mxu0 0.0
  %501 = vmatpush1.msra.mxu0 0.0
  %502 = vmatprep.subr.mxu0 0.0
  %503 = vmatpush1.msra.mxu0 0.0
  %504 = vmatprep.subr.mxu0 0.0
  %505 = vmatpush1.msra.mxu0 0.0
  %506 = vmatprep.subr.mxu0 0.0
  %507 = vmatpush1.msra.mxu0 0.0
  %508 = vmatprep.subr.mxu0 0.0
  %509 = vmatpush1.msra.mxu0 0.0
  %510 = vmatprep.subr.mxu0 0.0
  %511 = vmatpush1.msra.mxu0 0.0
  %512 = vmatprep.subr.mxu0 0.0
  %513 = vmatpush1.msra.mxu0 0.0
  %514 = vmatprep.subr.mxu0 0.0
  %515 = vmatpush1.msra.mxu0 0.0
  %516 = vmatprep.subr.mxu0 0.0
  %517 = vmatpush1.msra.mxu0 0.0
  %518 = vmatprep.subr.mxu0 0.0
  %519 = vmatpush1.msra.mxu0 0.0
  %520 = vmatprep.subr.mxu0 0.0
  %521 = vmatpush1.msra.mxu0 0.0
  %522 = vmatprep.subr.mxu0 0.0
  %523 = vmatpush1.msra.mxu0 0.0
  %524 = vmatprep.subr.mxu0 0.0
  %525 = vmatpush1.msra.mxu0 0.0
  %526 = vmatprep.subr.mxu0 0.0
  %527 = vmatpush1.msra.mxu0 0.0
  %528 = vmatprep.subr.mxu0 0.0
  %529 = vmatpush1.msra.mxu0 0.0
  %530 = vmatprep.subr.mxu0 0.0
  %531 = vmatpush1.msra.mxu0 0.0
  %532 = vmatprep.subr.mxu0 0.0
  %533 = vmatpush1.msra.mxu0 0.0
  %534 = vmatprep.subr.mxu0 0.0
  %535 = vmatpush1.msra.mxu0 0.0
  %536 = vmatprep.subr.mxu0 0.0
  %537 = vmatpush1.msra.mxu0 0.0
  %538 = vmatprep.subr.mxu0 0.0
  %539 = vmatpush1.msra.mxu0 0.0
  %540 = vmatprep.subr.mxu0 0.0
  %541 = vmatpush1.msra.mxu0 0.0
  %542 = vmatprep.subr.mxu0 0.0
  %543 = vmatpush1.msra.mxu0 0.0
  %544 = vmatprep.subr.mxu0 0.0
  %545 = vmatpush1.msra.mxu0 0.0
  %546 = vmatprep.mubr.f32.mxu0 0.0
  %547 = vmatmul.mubr.f32.gmra.mrb[0].mxu0 %v480
  %v548 = vpop.f32.mrb[0].mxu0
  %v549 = vadd.f32 %v466, %v548
  %v550 = vpop.f32.mrb[0].mxu0
  %551 = vdwg.mxu0
  %553 = vrot.lane.b32.xlu0 %v549, 32
  %v554 = vpop.permute.xlu0 %553
  %v556 = vsel %vm119, %v462, %v554
  %557 = vst.msk [vmem:[%s4] sm:$0xff] %vm36, %v556
  // Predicated region
  $region18: #{net_forward.1} parent=0 // pred_check
    _
  $region19: #{net_forward.1} parent=0 // pred_check_branch
    %559 = sbr.rel (0) target = $region21
  $region20: #{net_forward.1} parent=0 // pred_region
    _
  $region21: #{net_forward.1} parent=0 // pred_fallthru
    _
  // Predicated region
  $region22: #{net_forward.1} parent=0 // pred_check
    _
  $region23: #{net_forward.1} parent=0 // pred_check_branch
    %561 = sbr.rel (0) target = $region25
  $region24: #{net_forward.1} parent=0 // pred_region
    _
  $region25: #{net_forward.1} parent=0 // pred_fallthru
    _

</llo_original>
